<compile_context>
chip_gen: v7x
topology: tpu7x:2x2x1
jax: 0.10.0
libtpu: 0.0.40
codegen_flags: <defaults>
</compile_context>

<pallas_src>
import math

import jax
import jax.numpy as jnp
from jax.experimental import pallas as pl
from jax.experimental.pallas import tpu as pltpu


# ------------------------------ Pallas kernels -------------------------------
def _noisy_stack_resident_kernel(x_ref, wmu_ref, wsig_ref, ein_ref, eout_ref,
                                 beff_ref, o_ref):
    """All layer weights resident in VMEM; layer loop unrolled in-kernel.

    Grid = (batch_tile,). wmu/wsig are (n_layers, d_pad, d_pad) in the
    streaming dtype (bf16 by default); eps/bias rows are f32 (1, d_pad).
    """
    n_layers = wmu_ref.shape[0]
    w_dtype = wmu_ref.dtype

    h = x_ref[...]                                  # f32 (tb, d_pad)
    for l in range(n_layers):                       # small, static trip count
        hb = h.astype(w_dtype)
        hn = (h * ein_ref[l]).astype(w_dtype)       # noise applied in f32, cast once
        y = jnp.dot(hb, wmu_ref[l], preferred_element_type=jnp.float32)
        y = y + jnp.dot(hn, wsig_ref[l],
                        preferred_element_type=jnp.float32) * eout_ref[l]
        y = y + beff_ref[l]
        h = jnp.maximum(y, 0.0) if l < n_layers - 1 else y
    o_ref[...] = h.astype(o_ref.dtype)


def _noisy_stack_pipelined_kernel(x_ref, wmu_ref, wsig_ref, ein_ref, eout_ref,
                                  beff_ref, o_ref, h_ref):
    """Layer-pipelined variant. Grid = (batch_tile, layer).

    Activation is carried across the layer axis in the f32 VMEM scratch h_ref;
    weight blocks are streamed per layer (double-buffered by the pipeline).
    """
    l = pl.program_id(1)
    n_layers = pl.num_programs(1)
    w_dtype = wmu_ref.dtype

    @pl.when(l == 0)
    def _():
        h_ref[...] = x_ref[...].astype(h_ref.dtype)

    h = h_ref[...]                                  # f32 (tb, d_pad)
    hb = h.astype(w_dtype)
    hn = (h * ein_ref[...]).astype(w_dtype)
    y = jnp.dot(hb, wmu_ref[...], preferred_element_type=jnp.float32)
    y = y + jnp.dot(hn, wsig_ref[...],
                    preferred_element_type=jnp.float32) * eout_ref[...]
    y = y + beff_ref[...]

    @pl.when(l < n_layers - 1)
    def _():
        h_ref[...] = jnp.maximum(y, 0.0)

    @pl.when(l == n_layers - 1)
    def _():
        o_ref[...] = y.astype(o_ref.dtype)


# --------------------------------- wrapper -----------------------------------
def _round_up(x, m):
    return ((x + m - 1) // m) * m


def _compiler_params(sem, vmem_need_bytes):
    vmem_limit = None
    if vmem_need_bytes > (12 << 20):
        vmem_limit = int(min(60 << 20, vmem_need_bytes + (8 << 20)))
    return pltpu.CompilerParams(dimension_semantics=sem,
                                vmem_limit_bytes=vmem_limit)


def noisy_stack_forward(x, params, *, weights_dtype=jnp.bfloat16,
                        force_pipelined=False,
                        resident_weight_budget=12 << 20):
    """Forward: [NoisyLinear -> ReLU] * H -> NoisyLinear, one pallas_call.

    x: (B, in_dim) float32
    params: list of per-layer dicts with
        w_mu, w_sigma : (D_in, D_out)   (torch (out,in) transposed)
        b_mu, b_sigma : (D_out,)
        eps_in        : (D_in,)         factorized noise, input side
        eps_out       : (D_out,)        factorized noise (strength folded in)
    weights_dtype: streaming dtype for W_mu / W_sigma (accumulation is f32).
    """
    f32 = jnp.float32
    B, in_dim = x.shape
    dims = [in_dim] + [p["w_mu"].shape[1] for p in params]
    n_layers = len(params)
    d_out_final = dims[-1]

    # Common padded width for every layer. 128-multiples for small nets;
    # 256-multiples once real widths reach the 256-wide MXU of v6e/v7x.
    align = 256 if max(dims) >= 256 else 128
    d_pad = _round_up(max(dims), align)
    # Batch tile: multiple of 8 sublanes, capped at 256.
    tb = min(_round_up(max(B, 1), 8), 256)
    b_pad = _round_up(B, tb)
    grid_b = b_pad // tb

    itemsize = jnp.dtype(weights_dtype).itemsize
    weight_bytes = 2 * n_layers * d_pad * d_pad * itemsize
    use_resident = (not force_pipelined) and (weight_bytes <= resident_weight_budget)

    # ---- pad & stack parameters (zero padding => padded lanes stay zero) ----
    x_pad = jnp.zeros((b_pad, d_pad), f32).at[:B, :in_dim].set(x.astype(f32))

    w_mu = jnp.zeros((n_layers, d_pad, d_pad), weights_dtype)
    w_sig = jnp.zeros((n_layers, d_pad, d_pad), weights_dtype)
    e_in = jnp.zeros((n_layers, 1, d_pad), f32)     # lane-dense rows
    e_out = jnp.zeros((n_layers, 1, d_pad), f32)
    b_eff = jnp.zeros((n_layers, 1, d_pad), f32)
    for i, p in enumerate(params):
        di, do = dims[i], dims[i + 1]
        w_mu = w_mu.at[i, :di, :do].set(p["w_mu"].astype(weights_dtype))
        # NOTE: zero-padded w_sigma is load-bearing: it keeps eps_in*eps_out
        # noise out of the padded lanes/rows.
        w_sig = w_sig.at[i, :di, :do].set(p["w_sigma"].astype(weights_dtype))
        e_in = e_in.at[i, 0, :di].set(p["eps_in"].astype(f32))
        e_out = e_out.at[i, 0, :do].set(p["eps_out"].astype(f32))
        # Fold the (tiny) bias combine in the wrapper. Torch applies the same
        # `strength` to weight_epsilon AND bias_epsilon, so using the
        # strength-folded eps_out here matches the reference exactly.
        b_eff = b_eff.at[i, 0, :do].set(
            (p["b_mu"] + p["b_sigma"] * p["eps_out"]).astype(f32))

    if use_resident:
        vmem_need = (2 * weight_bytes                       # weights (x2 buf)
                     + 4 * tb * d_pad * 4                   # x/o blocks
                     + 6 * n_layers * d_pad * 4)            # eps / bias rows
        out_pad = pl.pallas_call(
            _noisy_stack_resident_kernel,
            out_shape=jax.ShapeDtypeStruct((b_pad, d_pad), f32),
            grid_spec=pltpu.PrefetchScalarGridSpec(
                num_scalar_prefetch=0,
                grid=(grid_b,),
                in_specs=[
                    pl.BlockSpec((tb, d_pad), lambda b: (b, 0)),               # x
                    pl.BlockSpec((n_layers, d_pad, d_pad), lambda b: (0, 0, 0)),  # w_mu
                    pl.BlockSpec((n_layers, d_pad, d_pad), lambda b: (0, 0, 0)),  # w_sigma
                    pl.BlockSpec((n_layers, 1, d_pad), lambda b: (0, 0, 0)),   # eps_in
                    pl.BlockSpec((n_layers, 1, d_pad), lambda b: (0, 0, 0)),   # eps_out
                    pl.BlockSpec((n_layers, 1, d_pad), lambda b: (0, 0, 0)),   # b_eff
                ],
                out_specs=pl.BlockSpec((tb, d_pad), lambda b: (b, 0)),
            ),
            compiler_params=_compiler_params(("parallel",), vmem_need),
        )(x_pad, w_mu, w_sig, e_in, e_out, b_eff)
    else:
        # Layer-pipelined fallback for large stacks: weights streamed per
        # layer; pl.Squeezed() drops the size-1 layer dim from kernel refs.
        vmem_need = (2 * 2 * 2 * d_pad * d_pad * itemsize   # 2 specs x 2 bufs
                     + 6 * tb * d_pad * 4                   # x/o blocks + scratch
                     + 12 * d_pad * 4)
        out_pad = pl.pallas_call(
            _noisy_stack_pipelined_kernel,
            out_shape=jax.ShapeDtypeStruct((b_pad, d_pad), f32),
            grid_spec=pltpu.PrefetchScalarGridSpec(
                num_scalar_prefetch=0,
                grid=(grid_b, n_layers),
                in_specs=[
                    pl.BlockSpec((tb, d_pad), lambda b, l: (b, 0)),                       # x
                    pl.BlockSpec((pl.Squeezed(), d_pad, d_pad), lambda b, l: (l, 0, 0)),  # w_mu
                    pl.BlockSpec((pl.Squeezed(), d_pad, d_pad), lambda b, l: (l, 0, 0)),  # w_sigma
                    pl.BlockSpec((pl.Squeezed(), 1, d_pad), lambda b, l: (l, 0, 0)),      # eps_in
                    pl.BlockSpec((pl.Squeezed(), 1, d_pad), lambda b, l: (l, 0, 0)),      # eps_out
                    pl.BlockSpec((pl.Squeezed(), 1, d_pad), lambda b, l: (l, 0, 0)),      # b_eff
                ],
                out_specs=pl.BlockSpec((tb, d_pad), lambda b, l: (b, 0)),
                scratch_shapes=[pltpu.VMEM((tb, d_pad), f32)],
            ),
            compiler_params=_compiler_params(("parallel", "arbitrary"), vmem_need),
        )(x_pad, w_mu, w_sig, e_in, e_out, b_eff)

    return out_pad[:B, :d_out_final]


# ---------------------------- parameter building ----------------------------
def _scale_noise(key, size):
    """Factorized gaussian noise scaling: sign(x) * sqrt(|x|)."""
    x = jax.random.normal(key, (size,), dtype=jnp.float32)
    return jnp.sign(x) * jnp.sqrt(jnp.abs(x))


def init_noisy_linear(key, in_features, out_features, std_init=0.5,
                      mu_range=None, noise_strength=1.0):
    """Deterministic re-implementation of NoisyLinear.__init__/reset_noise.

    Weights stored transposed to (in, out); noise kept factorized
    (eps_in, eps_out) — W_eps is never materialized."""
    if mu_range is None:
        mu_range = 1.0 / math.sqrt(in_features)
    else:
        mu_range = mu_range / math.sqrt(in_features)

    k_wmu, k_bmu, k_ein, k_eout = jax.random.split(key, 4)

    w_mu = jax.random.uniform(k_wmu, (in_features, out_features),
                              minval=-mu_range, maxval=mu_range,
                              dtype=jnp.float32)
    w_sigma = jnp.full((in_features, out_features),
                       std_init / math.sqrt(in_features), dtype=jnp.float32)
    b_mu = jax.random.uniform(k_bmu, (out_features,),
                              minval=-mu_range, maxval=mu_range,
                              dtype=jnp.float32)
    b_sigma = jnp.full((out_features,),
                       std_init / math.sqrt(out_features), dtype=jnp.float32)

    eps_in = _scale_noise(k_ein, in_features)
    # Fold noise strength into eps_out: W_eps = eps_in ⊗ (s*eps_out),
    # b_eps = s*eps_out — matches torch (strength scales BOTH epsilons).
    eps_out = noise_strength * _scale_noise(k_eout, out_features)

    return {"w_mu": w_mu, "w_sigma": w_sigma,
            "b_mu": b_mu, "b_sigma": b_sigma,
            "eps_in": eps_in, "eps_out": eps_out}


def init_noisy_stack(key, layers, in_dim, n_actions, n_atoms, std_init=0.5):
    """NoisyLinearNeuralStack params: hidden NoisyLinear+ReLU layers followed
    by a final NoisyLinear (reset_parameters(mu_range=0.001))."""
    params = []
    d = in_dim
    keys = jax.random.split(key, len(layers) + 1)
    for i, n in enumerate(layers):
        params.append(init_noisy_linear(keys[i], d, n, std_init=std_init))
        d = n
    params.append(init_noisy_linear(keys[-1], d, n_actions * n_atoms,
                                    std_init=std_init, mu_range=0.001))
    return params


# ------------------------------ pure-JAX reference ---------------------------
def noisy_stack_forward_ref(x, params):
    h = x
    n = len(params)
    for i, p in enumerate(params):
        w_eps = jnp.outer(p["eps_in"], p["eps_out"])          # (in, out)
        w = p["w_mu"] + p["w_sigma"] * w_eps
        b = p["b_mu"] + p["b_sigma"] * p["eps_out"]
        h = h @ w + b
        if i < n - 1:
            h = jnp.maximum(h, 0.0)
    return h


# ----------------------------------- main ------------------------------------
if __name__ == "__main__":
    key = jax.random.PRNGKey(0)
    k_params, k_x = jax.random.split(key)

    # Small, forward-consistent shapes.
    batch = 2
    in_dim = 64
    hidden_layers = [32, 32]
    n_actions = 4
    n_atoms = 8           # final layer width: n_actions * n_atoms = 32

    params = init_noisy_stack(k_params, hidden_layers, in_dim,
                              n_actions, n_atoms, std_init=0.5)
    x = jax.random.normal(k_x, (batch, in_dim), dtype=jnp.float32)
    ref = noisy_stack_forward_ref(x, params)

    # 1) Resident-weights path, exact f32 streaming (tight check).
    out_f32 = jax.block_until_ready(
        noisy_stack_forward(x, params, weights_dtype=jnp.float32))
    assert out_f32.shape == (batch, n_actions * n_atoms), out_f32.shape
    assert jnp.allclose(out_f32, ref, atol=1e-4, rtol=1e-4), \
        f"f32 resident max abs err = {jnp.max(jnp.abs(out_f32 - ref))}"

    # 2) Default perf path: resident weights streamed in bf16 (f32 accumulate).
    out_bf16 = jax.block_until_ready(noisy_stack_forward(x, params))
    assert out_bf16.shape == (batch, n_actions * n_atoms), out_bf16.shape
    assert jnp.allclose(out_bf16, ref, atol=3e-2, rtol=3e-2), \
        f"bf16 resident max abs err = {jnp.max(jnp.abs(out_bf16 - ref))}"

    # 3) Layer-pipelined fallback (used for large stacks), forced here in f32.
    out_pipe = jax.block_until_ready(
        noisy_stack_forward(x, params, weights_dtype=jnp.float32,
                            force_pipelined=True))
    assert out_pipe.shape == (batch, n_actions * n_atoms), out_pipe.shape
    assert jnp.allclose(out_pipe, ref, atol=1e-4, rtol=1e-4), \
        f"f32 pipelined max abs err = {jnp.max(jnp.abs(out_pipe - ref))}"

    print("KERNEL_OK")
</pallas_src>

<mosaic_0001>
module attributes {stable_mosaic.version = 11 : i64} {
  func.func @_noisy_stack_resident_kernel(%arg0: i32, %arg1: memref<8x128xf32, #tpu.memory_space<vmem>>, %arg2: memref<3x128x128xf32, #tpu.memory_space<vmem>>, %arg3: memref<3x128x128xf32, #tpu.memory_space<vmem>>, %arg4: memref<3x1x128xf32, #tpu.memory_space<vmem>>, %arg5: memref<3x1x128xf32, #tpu.memory_space<vmem>>, %arg6: memref<3x1x128xf32, #tpu.memory_space<vmem>>, %arg7: memref<8x128xf32, #tpu.memory_space<vmem>>) attributes {dimension_semantics = [#tpu.dimension_semantics<parallel>], iteration_bounds = array<i64: 1>, scalar_prefetch = 0 : i64, scratch_operands = 0 : i64, tpu.core_type = #tpu.core_type<tc>, window_params = [{transform_indices = @transform_0, window_bounds = array<i64: 8, 128>}, {pipeline_mode = #tpu.pipeline_mode<synchronous>, transform_indices = @transform_1, window_bounds = array<i64: 3, 128, 128>}, {pipeline_mode = #tpu.pipeline_mode<synchronous>, transform_indices = @transform_2, window_bounds = array<i64: 3, 128, 128>}, {pipeline_mode = #tpu.pipeline_mode<synchronous>, transform_indices = @transform_3, window_bounds = array<i64: 3, 1, 128>}, {pipeline_mode = #tpu.pipeline_mode<synchronous>, transform_indices = @transform_4, window_bounds = array<i64: 3, 1, 128>}, {pipeline_mode = #tpu.pipeline_mode<synchronous>, transform_indices = @transform_5, window_bounds = array<i64: 3, 1, 128>}, {transform_indices = @transform_6, window_bounds = array<i64: 8, 128>}]} {
    %c0 = arith.constant 0 : index
    %c0_0 = arith.constant 0 : index
    %0 = vector.load %arg1[%c0, %c0_0] : memref<8x128xf32, #tpu.memory_space<vmem>>, vector<8x128xf32>
    %c0_1 = arith.constant 0 : index
    %c0_2 = arith.constant 0 : index
    %c0_3 = arith.constant 0 : index
    %1 = vector.load %arg4[%c0_1, %c0_2, %c0_3] : memref<3x1x128xf32, #tpu.memory_space<vmem>>, vector<1x1x128xf32>
    %2 = vector.shape_cast %1 : vector<1x1x128xf32> to vector<1x128xf32>
    %3 = vector.broadcast %2 : vector<1x128xf32> to vector<8x128xf32>
    %4 = arith.mulf %0, %3 : vector<8x128xf32>
    %c0_4 = arith.constant 0 : index
    %c0_5 = arith.constant 0 : index
    %c0_6 = arith.constant 0 : index
    %5 = vector.load %arg2[%c0_4, %c0_5, %c0_6] : memref<3x128x128xf32, #tpu.memory_space<vmem>>, vector<1x128x128xf32>
    %6 = vector.shape_cast %5 : vector<1x128x128xf32> to vector<128x128xf32>
    %cst = arith.constant dense<0.000000e+00> : vector<8x128xf32>
    %7 = tpu.matmul %0, %6, %cst {dimension_numbers = #tpu.dot_dimension_numbers<[1], [0], [0], [1], [0, 0, 1, 1], [], []>} : vector<8x128xf32>, vector<128x128xf32>, vector<8x128xf32> -> vector<8x128xf32>
    %c0_7 = arith.constant 0 : index
    %c0_8 = arith.constant 0 : index
    %c0_9 = arith.constant 0 : index
    %8 = vector.load %arg3[%c0_7, %c0_8, %c0_9] : memref<3x128x128xf32, #tpu.memory_space<vmem>>, vector<1x128x128xf32>
    %9 = vector.shape_cast %8 : vector<1x128x128xf32> to vector<128x128xf32>
    %cst_10 = arith.constant dense<0.000000e+00> : vector<8x128xf32>
    %10 = tpu.matmul %4, %9, %cst_10 {dimension_numbers = #tpu.dot_dimension_numbers<[1], [0], [0], [1], [0, 0, 1, 1], [], []>} : vector<8x128xf32>, vector<128x128xf32>, vector<8x128xf32> -> vector<8x128xf32>
    %c0_11 = arith.constant 0 : index
    %c0_12 = arith.constant 0 : index
    %c0_13 = arith.constant 0 : index
    %11 = vector.load %arg5[%c0_11, %c0_12, %c0_13] : memref<3x1x128xf32, #tpu.memory_space<vmem>>, vector<1x1x128xf32>
    %12 = vector.shape_cast %11 : vector<1x1x128xf32> to vector<1x128xf32>
    %13 = vector.broadcast %12 : vector<1x128xf32> to vector<8x128xf32>
    %14 = arith.mulf %10, %13 : vector<8x128xf32>
    %15 = arith.addf %7, %14 : vector<8x128xf32>
    %c0_14 = arith.constant 0 : index
    %c0_15 = arith.constant 0 : index
    %c0_16 = arith.constant 0 : index
    %16 = vector.load %arg6[%c0_14, %c0_15, %c0_16] : memref<3x1x128xf32, #tpu.memory_space<vmem>>, vector<1x1x128xf32>
    %17 = vector.shape_cast %16 : vector<1x1x128xf32> to vector<1x128xf32>
    %18 = vector.broadcast %17 : vector<1x128xf32> to vector<8x128xf32>
    %19 = arith.addf %15, %18 : vector<8x128xf32>
    %cst_17 = arith.constant 0.000000e+00 : f32
    %20 = vector.broadcast %cst_17 : f32 to vector<8x128xf32>
    %21 = arith.maximumf %19, %20 : vector<8x128xf32>
    %c1 = arith.constant 1 : index
    %c0_18 = arith.constant 0 : index
    %c0_19 = arith.constant 0 : index
    %22 = vector.load %arg4[%c1, %c0_18, %c0_19] : memref<3x1x128xf32, #tpu.memory_space<vmem>>, vector<1x1x128xf32>
    %23 = vector.shape_cast %22 : vector<1x1x128xf32> to vector<1x128xf32>
    %24 = vector.broadcast %23 : vector<1x128xf32> to vector<8x128xf32>
    %25 = arith.mulf %21, %24 : vector<8x128xf32>
    %c1_20 = arith.constant 1 : index
    %c0_21 = arith.constant 0 : index
    %c0_22 = arith.constant 0 : index
    %26 = vector.load %arg2[%c1_20, %c0_21, %c0_22] : memref<3x128x128xf32, #tpu.memory_space<vmem>>, vector<1x128x128xf32>
    %27 = vector.shape_cast %26 : vector<1x128x128xf32> to vector<128x128xf32>
    %cst_23 = arith.constant dense<0.000000e+00> : vector<8x128xf32>
    %28 = tpu.matmul %21, %27, %cst_23 {dimension_numbers = #tpu.dot_dimension_numbers<[1], [0], [0], [1], [0, 0, 1, 1], [], []>} : vector<8x128xf32>, vector<128x128xf32>, vector<8x128xf32> -> vector<8x128xf32>
    %c1_24 = arith.constant 1 : index
    %c0_25 = arith.constant 0 : index
    %c0_26 = arith.constant 0 : index
    %29 = vector.load %arg3[%c1_24, %c0_25, %c0_26] : memref<3x128x128xf32, #tpu.memory_space<vmem>>, vector<1x128x128xf32>
    %30 = vector.shape_cast %29 : vector<1x128x128xf32> to vector<128x128xf32>
    %cst_27 = arith.constant dense<0.000000e+00> : vector<8x128xf32>
    %31 = tpu.matmul %25, %30, %cst_27 {dimension_numbers = #tpu.dot_dimension_numbers<[1], [0], [0], [1], [0, 0, 1, 1], [], []>} : vector<8x128xf32>, vector<128x128xf32>, vector<8x128xf32> -> vector<8x128xf32>
    %c1_28 = arith.constant 1 : index
    %c0_29 = arith.constant 0 : index
    %c0_30 = arith.constant 0 : index
    %32 = vector.load %arg5[%c1_28, %c0_29, %c0_30] : memref<3x1x128xf32, #tpu.memory_space<vmem>>, vector<1x1x128xf32>
    %33 = vector.shape_cast %32 : vector<1x1x128xf32> to vector<1x128xf32>
    %34 = vector.broadcast %33 : vector<1x128xf32> to vector<8x128xf32>
    %35 = arith.mulf %31, %34 : vector<8x128xf32>
    %36 = arith.addf %28, %35 : vector<8x128xf32>
    %c1_31 = arith.constant 1 : index
    %c0_32 = arith.constant 0 : index
    %c0_33 = arith.constant 0 : index
    %37 = vector.load %arg6[%c1_31, %c0_32, %c0_33] : memref<3x1x128xf32, #tpu.memory_space<vmem>>, vector<1x1x128xf32>
    %38 = vector.shape_cast %37 : vector<1x1x128xf32> to vector<1x128xf32>
    %39 = vector.broadcast %38 : vector<1x128xf32> to vector<8x128xf32>
    %40 = arith.addf %36, %39 : vector<8x128xf32>
    %cst_34 = arith.constant 0.000000e+00 : f32
    %41 = vector.broadcast %cst_34 : f32 to vector<8x128xf32>
    %42 = arith.maximumf %40, %41 : vector<8x128xf32>
    %c2 = arith.constant 2 : index
    %c0_35 = arith.constant 0 : index
    %c0_36 = arith.constant 0 : index
    %43 = vector.load %arg4[%c2, %c0_35, %c0_36] : memref<3x1x128xf32, #tpu.memory_space<vmem>>, vector<1x1x128xf32>
    %44 = vector.shape_cast %43 : vector<1x1x128xf32> to vector<1x128xf32>
    %45 = vector.broadcast %44 : vector<1x128xf32> to vector<8x128xf32>
    %46 = arith.mulf %42, %45 : vector<8x128xf32>
    %c2_37 = arith.constant 2 : index
    %c0_38 = arith.constant 0 : index
    %c0_39 = arith.constant 0 : index
    %47 = vector.load %arg2[%c2_37, %c0_38, %c0_39] : memref<3x128x128xf32, #tpu.memory_space<vmem>>, vector<1x128x128xf32>
    %48 = vector.shape_cast %47 : vector<1x128x128xf32> to vector<128x128xf32>
    %cst_40 = arith.constant dense<0.000000e+00> : vector<8x128xf32>
    %49 = tpu.matmul %42, %48, %cst_40 {dimension_numbers = #tpu.dot_dimension_numbers<[1], [0], [0], [1], [0, 0, 1, 1], [], []>} : vector<8x128xf32>, vector<128x128xf32>, vector<8x128xf32> -> vector<8x128xf32>
    %c2_41 = arith.constant 2 : index
    %c0_42 = arith.constant 0 : index
    %c0_43 = arith.constant 0 : index
    %50 = vector.load %arg3[%c2_41, %c0_42, %c0_43] : memref<3x128x128xf32, #tpu.memory_space<vmem>>, vector<1x128x128xf32>
    %51 = vector.shape_cast %50 : vector<1x128x128xf32> to vector<128x128xf32>
    %cst_44 = arith.constant dense<0.000000e+00> : vector<8x128xf32>
    %52 = tpu.matmul %46, %51, %cst_44 {dimension_numbers = #tpu.dot_dimension_numbers<[1], [0], [0], [1], [0, 0, 1, 1], [], []>} : vector<8x128xf32>, vector<128x128xf32>, vector<8x128xf32> -> vector<8x128xf32>
    %c2_45 = arith.constant 2 : index
    %c0_46 = arith.constant 0 : index
    %c0_47 = arith.constant 0 : index
    %53 = vector.load %arg5[%c2_45, %c0_46, %c0_47] : memref<3x1x128xf32, #tpu.memory_space<vmem>>, vector<1x1x128xf32>
    %54 = vector.shape_cast %53 : vector<1x1x128xf32> to vector<1x128xf32>
    %55 = vector.broadcast %54 : vector<1x128xf32> to vector<8x128xf32>
    %56 = arith.mulf %52, %55 : vector<8x128xf32>
    %57 = arith.addf %49, %56 : vector<8x128xf32>
    %c2_48 = arith.constant 2 : index
    %c0_49 = arith.constant 0 : index
    %c0_50 = arith.constant 0 : index
    %58 = vector.load %arg6[%c2_48, %c0_49, %c0_50] : memref<3x1x128xf32, #tpu.memory_space<vmem>>, vector<1x1x128xf32>
    %59 = vector.shape_cast %58 : vector<1x1x128xf32> to vector<1x128xf32>
    %60 = vector.broadcast %59 : vector<1x128xf32> to vector<8x128xf32>
    %61 = arith.addf %57, %60 : vector<8x128xf32>
    %c0_51 = arith.constant 0 : index
    %c0_52 = arith.constant 0 : index
    %62 = vector.load %arg7[%c0_51, %c0_52] : memref<8x128xf32, #tpu.memory_space<vmem>>, vector<8x128xf32>
    tpu.vector_store %arg7[%c0_51, %c0_52], %61 {strides = array<i32>} : memref<8x128xf32, #tpu.memory_space<vmem>>, vector<8x128xf32>,
    return
  }
  func.func @transform_0(%arg0: i32) -> (i32, i32) {
    %c0_i32 = arith.constant 0 : i32
    %c0_i32_0 = arith.constant 0 : i32
    return %arg0, %c0_i32 : i32, i32
  }
  func.func @transform_1(%arg0: i32) -> (i32, i32, i32) {
    %c0_i32 = arith.constant 0 : i32
    %c0_i32_0 = arith.constant 0 : i32
    %c0_i32_1 = arith.constant 0 : i32
    %c0_i32_2 = arith.constant 0 : i32
    return %c0_i32, %c0_i32_0, %c0_i32_1 : i32, i32, i32
  }
  func.func @transform_2(%arg0: i32) -> (i32, i32, i32) {
    %c0_i32 = arith.constant 0 : i32
    %c0_i32_0 = arith.constant 0 : i32
    %c0_i32_1 = arith.constant 0 : i32
    %c0_i32_2 = arith.constant 0 : i32
    return %c0_i32, %c0_i32_0, %c0_i32_1 : i32, i32, i32
  }
  func.func @transform_3(%arg0: i32) -> (i32, i32, i32) {
    %c0_i32 = arith.constant 0 : i32
    %c0_i32_0 = arith.constant 0 : i32
    %c0_i32_1 = arith.constant 0 : i32
    %c0_i32_2 = arith.constant 0 : i32
    return %c0_i32, %c0_i32_0, %c0_i32_1 : i32, i32, i32
  }
  func.func @transform_4(%arg0: i32) -> (i32, i32, i32) {
    %c0_i32 = arith.constant 0 : i32
    %c0_i32_0 = arith.constant 0 : i32
    %c0_i32_1 = arith.constant 0 : i32
    %c0_i32_2 = arith.constant 0 : i32
    return %c0_i32, %c0_i32_0, %c0_i32_1 : i32, i32, i32
  }
  func.func @transform_5(%arg0: i32) -> (i32, i32, i32) {
    %c0_i32 = arith.constant 0 : i32
    %c0_i32_0 = arith.constant 0 : i32
    %c0_i32_1 = arith.constant 0 : i32
    %c0_i32_2 = arith.constant 0 : i32
    return %c0_i32, %c0_i32_0, %c0_i32_1 : i32, i32, i32
  }
  func.func @transform_6(%arg0: i32) -> (i32, i32) {
    %c0_i32 = arith.constant 0 : i32
    %c0_i32_0 = arith.constant 0 : i32
    return %arg0, %c0_i32 : i32, i32
  }
}

</mosaic_0001>

<llo_original>
// kernel: tpu_custom_call.1
$region0: #{tpu_custom_call.1}
  #allocation0 [shape = 'u32[]', space=smem, size = 0x4, offset = 0x4, fixed_abs, tag = 'smem constant byte address 0x4 - core index']
  #allocation1 [shape = 'u32[144,128]{1,0:T(1,128)}', space=vmem, size = 0x12000, scoped, tag = 'internal scratch']
  %s0 = inlined_call_operand.hbm [shape: f32[8,128], index: 0, kind: input, shape index: {}]
  %s1 = inlined_call_operand.hbm [shape: f32[3,128,128], index: 1, kind: input, shape index: {}]
  %s2 = inlined_call_operand.hbm [shape: f32[3,128,128], index: 2, kind: input, shape index: {}]
  %s3 = inlined_call_operand.vmem [shape: f32[3,1,128], index: 3, kind: input, shape index: {}]
  %s4 = inlined_call_operand.vmem [shape: f32[3,1,128], index: 4, kind: input, shape index: {}]
  %s5 = inlined_call_operand.vmem [shape: f32[3,1,128], index: 5, kind: input, shape index: {}]
  %s6 = inlined_call_operand.hbm [shape: f32[8,128], index: 6, kind: output, shape index: {}]
  %s7 = sld [smem:[#allocation0]]
  $region46: #{tpu_custom_call.1} parent=0
    _
  %s9 = ssub.s32 1, %s7
  %s10 = scalar_select 0, %s9, %s7
  $region1: #{tpu_custom_call.1} parent=0
    #allocation2 [shape = 'u8[4096]{0}', space=vmem, size = 0x1000, scoped, tag = 'input window, operand 0, single buffered']
    #allocation3 [shape = 's32[1]{0}', space=sflag, size = 0x4, scoped, tag = 'scoped memory for tpu_custom_call.1']
    #allocation4 [shape = 's32[1]{0}', space=sflag, size = 0x4, scoped, tag = 'scoped memory for tpu_custom_call.1']
    #allocation5 [shape = 'u8[196608]{0}', space=vmem, size = 0x30000, scoped, tag = 'input window, operand 1, single buffered']
    #allocation6 [shape = 's32[1]{0}', space=sflag, size = 0x4, scoped, tag = 'scoped memory for tpu_custom_call.1']
    #allocation7 [shape = 'u8[196608]{0}', space=vmem, size = 0x30000, scoped, tag = 'input window, operand 2, single buffered']
    #allocation8 [shape = 'u8[4096]{0}', space=vmem, size = 0x1000, scoped, tag = 'output window, operand 0, single buffered']
    %11 = vsyncpa [#allocation3], 0
    %12 = vsyncpa [#allocation6], 0
    %13 = vsyncpa [#allocation4], 0
    // Predicated region
    $region2: #{tpu_custom_call.1} parent=1 // pred_check
      _
    $region3: #{tpu_custom_call.1} parent=1 // pred_check_branch
      %15 = sbr.rel (0) target = $region5
    $region4: #{tpu_custom_call.1} parent=1 // pred_region
      %s17 = ssub.s32 128, 128
      %18 = vsyncadd [#allocation3], %s17
      %s20 = sshll.u32 [#allocation2], 4
      %s21 = int_to_ptr.vmem [resolvable:$true] %s20
      %23 = dma.hbm_to_vmem [thread:$0]  %s0, 128, %s21, [#allocation3]
    $region5: #{tpu_custom_call.1} parent=1 // pred_fallthru
      _
    // Predicated region
    $region6: #{tpu_custom_call.1} parent=1 // pred_check
      _
    $region7: #{tpu_custom_call.1} parent=1 // pred_check_branch
      %25 = sbr.rel (0) target = $region9
    $region8: #{tpu_custom_call.1} parent=1 // pred_region
      %s27 = ssub.s32 6144, 6144
      %28 = vsyncadd [#allocation6], %s27
      %s29 = sshll.u32 [#allocation5], 4
      %s30 = int_to_ptr.vmem [resolvable:$true] %s29
      %35 = dma.hbm_to_vmem [thread:$0]  %s1, 6144, %s30, [#allocation6], 128, 128, 8
    $region9: #{tpu_custom_call.1} parent=1 // pred_fallthru
      _
    // Predicated region
    $region10: #{tpu_custom_call.1} parent=1 // pred_check
      _
    $region11: #{tpu_custom_call.1} parent=1 // pred_check_branch
      %37 = sbr.rel (0) target = $region13
    $region12: #{tpu_custom_call.1} parent=1 // pred_region
      %s39 = ssub.s32 6144, 6144
      %40 = vsyncadd [#allocation6], %s39
      %s41 = sshll.u32 [#allocation7], 4
      %s42 = int_to_ptr.vmem [resolvable:$true] %s41
      %47 = dma.hbm_to_vmem [thread:$0]  %s2, 6144, %s42, [#allocation6], 128, 128, 8
    $region13: #{tpu_custom_call.1} parent=1 // pred_fallthru
      _
    // Predicated region
    $region14: #{tpu_custom_call.1} parent=1 // pred_check
      _
    $region15: #{tpu_custom_call.1} parent=1 // pred_check_branch
      %49 = sbr.rel (0) target = $region17
    $region16: #{tpu_custom_call.1} parent=1 // pred_region
      _
    $region17: #{tpu_custom_call.1} parent=1 // pred_fallthru
      _
    // Predicated region
    $region18: #{tpu_custom_call.1} parent=1 // pred_check
      _
    $region19: #{tpu_custom_call.1} parent=1 // pred_check_branch
      %51 = sbr.rel (0) target = $region21
    $region20: #{tpu_custom_call.1} parent=1 // pred_region
      _
    $region21: #{tpu_custom_call.1} parent=1 // pred_fallthru
      _
    // Predicated region
    $region22: #{tpu_custom_call.1} parent=1 // pred_check
      _
    $region23: #{tpu_custom_call.1} parent=1 // pred_check_branch
      %53 = sbr.rel (0) target = $region25
    $region24: #{tpu_custom_call.1} parent=1 // pred_region
      _
    $region25: #{tpu_custom_call.1} parent=1 // pred_fallthru
      _
    // Predicated region
    $region26: #{tpu_custom_call.1} parent=1 // pred_check
      _
    $region27: #{tpu_custom_call.1} parent=1 // pred_check_branch
      %55 = sbr.rel (0) target = $region29
    $region28: #{tpu_custom_call.1} parent=1 // pred_region
      %56 = dma.done [#allocation3], 128
    $region29: #{tpu_custom_call.1} parent=1 // pred_fallthru
      _
    // Predicated region
    $region30: #{tpu_custom_call.1} parent=1 // pred_check
      _
    $region31: #{tpu_custom_call.1} parent=1 // pred_check_branch
      %58 = sbr.rel (0) target = $region33
    $region32: #{tpu_custom_call.1} parent=1 // pred_region
      %59 = dma.done [#allocation6], 6144
    $region33: #{tpu_custom_call.1} parent=1 // pred_fallthru
      _
    // Predicated region
    $region34: #{tpu_custom_call.1} parent=1 // pred_check
      _
    $region35: #{tpu_custom_call.1} parent=1 // pred_check_branch
      %61 = sbr.rel (0) target = $region37
    $region36: #{tpu_custom_call.1} parent=1 // pred_region
      %62 = dma.done [#allocation6], 6144
    $region37: #{tpu_custom_call.1} parent=1 // pred_fallthru
      _
    %v63 = vld [vmem:[#allocation2] sm:$0xff]
    %v64 = vld [vmem:[%s3] sm:$0x1]
    %v66 = vlaneseq
    %v67 = vshrl.u32 %v66, 7
    %v68 = vsub.s32 0, %v67
    %v69 = vrot.slane %v64, %v68
    %v71 = vmul.f32 %v63, %v69
    %v72 = vld [vmem:[#allocation5] sm:$0xff]
    %v73 = vld [vmem:[#allocation5 + $0x8] sm:$0xff]
    %v74 = vld [vmem:[#allocation5 + $0x10] sm:$0xff]
    %v75 = vld [vmem:[#allocation5 + $0x18] sm:$0xff]
    %v76 = vld [vmem:[#allocation5 + $0x20] sm:$0xff]
    %v77 = vld [vmem:[#allocation5 + $0x28] sm:$0xff]
    %v78 = vld [vmem:[#allocation5 + $0x30] sm:$0xff]
    %v79 = vld [vmem:[#allocation5 + $0x38] sm:$0xff]
    %v80 = vld [vmem:[#allocation5 + $0x40] sm:$0xff]
    %v81 = vld [vmem:[#allocation5 + $0x48] sm:$0xff]
    %v82 = vld [vmem:[#allocation5 + $0x50] sm:$0xff]
    %v83 = vld [vmem:[#allocation5 + $0x58] sm:$0xff]
    %v84 = vld [vmem:[#allocation5 + $0x60] sm:$0xff]
    %v85 = vld [vmem:[#allocation5 + $0x68] sm:$0xff]
    %v86 = vld [vmem:[#allocation5 + $0x70] sm:$0xff]
    %v87 = vld [vmem:[#allocation5 + $0x78] sm:$0xff]
    %v88 = vld [vmem:[#allocation7] sm:$0xff]
    %v89 = vld [vmem:[#allocation7 + $0x8] sm:$0xff]
    %v90 = vld [vmem:[#allocation7 + $0x10] sm:$0xff]
    %v91 = vld [vmem:[#allocation7 + $0x18] sm:$0xff]
    %v92 = vld [vmem:[#allocation7 + $0x20] sm:$0xff]
    %v93 = vld [vmem:[#allocation7 + $0x28] sm:$0xff]
    %v94 = vld [vmem:[#allocation7 + $0x30] sm:$0xff]
    %v95 = vld [vmem:[#allocation7 + $0x38] sm:$0xff]
    %v96 = vld [vmem:[#allocation7 + $0x40] sm:$0xff]
    %v97 = vld [vmem:[#allocation7 + $0x48] sm:$0xff]
    %v98 = vld [vmem:[#allocation7 + $0x50] sm:$0xff]
    %v99 = vld [vmem:[#allocation7 + $0x58] sm:$0xff]
    %v100 = vld [vmem:[#allocation7 + $0x60] sm:$0xff]
    %v101 = vld [vmem:[#allocation7 + $0x68] sm:$0xff]
    %v102 = vld [vmem:[#allocation7 + $0x70] sm:$0xff]
    %v103 = vld [vmem:[#allocation7 + $0x78] sm:$0xff]
    %104 = vmatprep.subr.mxu0 0.0
    %105 = vmatpush1.msra.mxu0 %v88
    %106 = vmatprep.subr.mxu0 0.0
    %107 = vmatpush1.msra.mxu0 %v89
    %108 = vmatprep.subr.mxu0 0.0
    %109 = vmatpush1.msra.mxu0 %v90
    %110 = vmatprep.subr.mxu0 0.0
    %111 = vmatpush1.msra.mxu0 %v91
    %112 = vmatprep.subr.mxu0 0.0
    %113 = vmatpush1.msra.mxu0 %v92
    %114 = vmatprep.subr.mxu0 0.0
    %115 = vmatpush1.msra.mxu0 %v93
    %116 = vmatprep.subr.mxu0 0.0
    %117 = vmatpush1.msra.mxu0 %v94
    %118 = vmatprep.subr.mxu0 0.0
    %119 = vmatpush1.msra.mxu0 %v95
    %120 = vmatprep.subr.mxu0 0.0
    %121 = vmatpush1.msra.mxu0 %v96
    %122 = vmatprep.subr.mxu0 0.0
    %123 = vmatpush1.msra.mxu0 %v97
    %124 = vmatprep.subr.mxu0 0.0
    %125 = vmatpush1.msra.mxu0 %v98
    %126 = vmatprep.subr.mxu0 0.0
    %127 = vmatpush1.msra.mxu0 %v99
    %128 = vmatprep.subr.mxu0 0.0
    %129 = vmatpush1.msra.mxu0 %v100
    %130 = vmatprep.subr.mxu0 0.0
    %131 = vmatpush1.msra.mxu0 %v101
    %132 = vmatprep.subr.mxu0 0.0
    %133 = vmatpush1.msra.mxu0 %v102
    %134 = vmatprep.subr.mxu0 0.0
    %135 = vmatpush1.msra.mxu0 %v103
    %136 = vmatprep.subr.mxu0 0.0
    %137 = vmatpush1.msra.mxu0 0.0
    %138 = vmatprep.subr.mxu0 0.0
    %139 = vmatpush1.msra.mxu0 0.0
    %140 = vmatprep.subr.mxu0 0.0
    %141 = vmatpush1.msra.mxu0 0.0
    %142 = vmatprep.subr.mxu0 0.0
    %143 = vmatpush1.msra.mxu0 0.0
    %144 = vmatprep.subr.mxu0 0.0
    %145 = vmatpush1.msra.mxu0 0.0
    %146 = vmatprep.subr.mxu0 0.0
    %147 = vmatpush1.msra.mxu0 0.0
    %148 = vmatprep.subr.mxu0 0.0
    %149 = vmatpush1.msra.mxu0 0.0
    %150 = vmatprep.subr.mxu0 0.0
    %151 = vmatpush1.msra.mxu0 0.0
    %152 = vmatprep.subr.mxu0 0.0
    %153 = vmatpush1.msra.mxu0 0.0
    %154 = vmatprep.subr.mxu0 0.0
    %155 = vmatpush1.msra.mxu0 0.0
    %156 = vmatprep.subr.mxu0 0.0
    %157 = vmatpush1.msra.mxu0 0.0
    %158 = vmatprep.subr.mxu0 0.0
    %159 = vmatpush1.msra.mxu0 0.0
    %160 = vmatprep.subr.mxu0 0.0
    %161 = vmatpush1.msra.mxu0 0.0
    %162 = vmatprep.subr.mxu0 0.0
    %163 = vmatpush1.msra.mxu0 0.0
    %164 = vmatprep.subr.mxu0 0.0
    %165 = vmatpush1.msra.mxu0 0.0
    %166 = vmatprep.subr.mxu0 0.0
    %167 = vmatpush1.msra.mxu0 0.0
    %168 = vmatprep.mubr.f32.mxu0 0.0
    %169 = vmatmul.mubr.f32.gmra.mrb[0].mxu0 %v71
    %v170 = vpop.f32.mrb[0].mxu0
    %v171 = vadd.f32 0.0, %v170
    %v172 = vpop.f32.mrb[0].mxu0
    %173 = vdwg.mxu0
    %v174 = vld [vmem:[%s4] sm:$0x1]
    %v176 = vlaneseq
    %v177 = vshrl.u32 %v176, 7
    %v178 = vsub.s32 0, %v177
    %v179 = vrot.slane %v174, %v178
    %v181 = vmul.f32 %v171, %v179
    %182 = vmatprep.subr.mxu0 0.0
    %183 = vmatpush1.msra.mxu0 %v72
    %184 = vmatprep.subr.mxu0 0.0
    %185 = vmatpush1.msra.mxu0 %v73
    %186 = vmatprep.subr.mxu0 0.0
    %187 = vmatpush1.msra.mxu0 %v74
    %188 = vmatprep.subr.mxu0 0.0
    %189 = vmatpush1.msra.mxu0 %v75
    %190 = vmatprep.subr.mxu0 0.0
    %191 = vmatpush1.msra.mxu0 %v76
    %192 = vmatprep.subr.mxu0 0.0
    %193 = vmatpush1.msra.mxu0 %v77
    %194 = vmatprep.subr.mxu0 0.0
    %195 = vmatpush1.msra.mxu0 %v78
    %196 = vmatprep.subr.mxu0 0.0
    %197 = vmatpush1.msra.mxu0 %v79
    %198 = vmatprep.subr.mxu0 0.0
    %199 = vmatpush1.msra.mxu0 %v80
    %200 = vmatprep.subr.mxu0 0.0
    %201 = vmatpush1.msra.mxu0 %v81
    %202 = vmatprep.subr.mxu0 0.0
    %203 = vmatpush1.msra.mxu0 %v82
    %204 = vmatprep.subr.mxu0 0.0
    %205 = vmatpush1.msra.mxu0 %v83
    %206 = vmatprep.subr.mxu0 0.0
    %207 = vmatpush1.msra.mxu0 %v84
    %208 = vmatprep.subr.mxu0 0.0
    %209 = vmatpush1.msra.mxu0 %v85
    %210 = vmatprep.subr.mxu0 0.0
    %211 = vmatpush1.msra.mxu0 %v86
    %212 = vmatprep.subr.mxu0 0.0
    %213 = vmatpush1.msra.mxu0 %v87
    %214 = vmatprep.subr.mxu0 0.0
    %215 = vmatpush1.msra.mxu0 0.0
    %216 = vmatprep.subr.mxu0 0.0
    %217 = vmatpush1.msra.mxu0 0.0
    %218 = vmatprep.subr.mxu0 0.0
    %219 = vmatpush1.msra.mxu0 0.0
    %220 = vmatprep.subr.mxu0 0.0
    %221 = vmatpush1.msra.mxu0 0.0
    %222 = vmatprep.subr.mxu0 0.0
    %223 = vmatpush1.msra.mxu0 0.0
    %224 = vmatprep.subr.mxu0 0.0
    %225 = vmatpush1.msra.mxu0 0.0
    %226 = vmatprep.subr.mxu0 0.0
    %227 = vmatpush1.msra.mxu0 0.0
    %228 = vmatprep.subr.mxu0 0.0
    %229 = vmatpush1.msra.mxu0 0.0
    %230 = vmatprep.subr.mxu0 0.0
    %231 = vmatpush1.msra.mxu0 0.0
    %232 = vmatprep.subr.mxu0 0.0
    %233 = vmatpush1.msra.mxu0 0.0
    %234 = vmatprep.subr.mxu0 0.0
    %235 = vmatpush1.msra.mxu0 0.0
    %236 = vmatprep.subr.mxu0 0.0
    %237 = vmatpush1.msra.mxu0 0.0
    %238 = vmatprep.subr.mxu0 0.0
    %239 = vmatpush1.msra.mxu0 0.0
    %240 = vmatprep.subr.mxu0 0.0
    %241 = vmatpush1.msra.mxu0 0.0
    %242 = vmatprep.subr.mxu0 0.0
    %243 = vmatpush1.msra.mxu0 0.0
    %244 = vmatprep.subr.mxu0 0.0
    %245 = vmatpush1.msra.mxu0 0.0
    %246 = vmatprep.mubr.f32.mxu0 0.0
    %247 = vmatmul.mubr.f32.gmra.mrb[0].mxu0 %v63
    %v248 = vpop.f32.mrb[0].mxu0
    %v249 = vadd.f32 %v181, %v248
    %v250 = vpop.f32.mrb[0].mxu0
    %251 = vdwg.mxu0
    %v252 = vld [vmem:[%s5] sm:$0x1]
    %v254 = vlaneseq
    %v255 = vshrl.u32 %v254, 7
    %v256 = vsub.s32 0, %v255
    %v257 = vrot.slane %v252, %v256
    %v259 = vadd.f32 %v249, %v257
    %v260 = vmax.f32 %v259, 0.0
    %s261 = scalar_lea.vmem %s3, 1
    %v262 = vld [vmem:[%s261] sm:$0x1]
    %v264 = vlaneseq
    %v265 = vshrl.u32 %v264, 7
    %v266 = vsub.s32 0, %v265
    %v267 = vrot.slane %v262, %v266
    %v269 = vmul.f32 %v260, %v267
    %s270 = scalar_lea.vmem [#allocation5], 128
    %v271 = vld [vmem:[%s270] sm:$0xff]
    %v272 = vld [vmem:[%s270 + $0x8] sm:$0xff]
    %v273 = vld [vmem:[%s270 + $0x10] sm:$0xff]
    %v274 = vld [vmem:[%s270 + $0x18] sm:$0xff]
    %v275 = vld [vmem:[%s270 + $0x20] sm:$0xff]
    %v276 = vld [vmem:[%s270 + $0x28] sm:$0xff]
    %v277 = vld [vmem:[%s270 + $0x30] sm:$0xff]
    %v278 = vld [vmem:[%s270 + $0x38] sm:$0xff]
    %v279 = vld [vmem:[%s270 + $0x40] sm:$0xff]
    %v280 = vld [vmem:[%s270 + $0x48] sm:$0xff]
    %v281 = vld [vmem:[%s270 + $0x50] sm:$0xff]
    %v282 = vld [vmem:[%s270 + $0x58] sm:$0xff]
    %v283 = vld [vmem:[%s270 + $0x60] sm:$0xff]
    %v284 = vld [vmem:[%s270 + $0x68] sm:$0xff]
    %v285 = vld [vmem:[%s270 + $0x70] sm:$0xff]
    %v286 = vld [vmem:[%s270 + $0x78] sm:$0xff]
    %s287 = scalar_lea.vmem [#allocation7], 128
    %v288 = vld [vmem:[%s287] sm:$0xff]
    %v289 = vld [vmem:[%s287 + $0x8] sm:$0xff]
    %v290 = vld [vmem:[%s287 + $0x10] sm:$0xff]
    %v291 = vld [vmem:[%s287 + $0x18] sm:$0xff]
    %v292 = vld [vmem:[%s287 + $0x20] sm:$0xff]
    %v293 = vld [vmem:[%s287 + $0x28] sm:$0xff]
    %v294 = vld [vmem:[%s287 + $0x30] sm:$0xff]
    %v295 = vld [vmem:[%s287 + $0x38] sm:$0xff]
    %v296 = vld [vmem:[%s287 + $0x40] sm:$0xff]
    %v297 = vld [vmem:[%s287 + $0x48] sm:$0xff]
    %v298 = vld [vmem:[%s287 + $0x50] sm:$0xff]
    %v299 = vld [vmem:[%s287 + $0x58] sm:$0xff]
    %v300 = vld [vmem:[%s287 + $0x60] sm:$0xff]
    %v301 = vld [vmem:[%s287 + $0x68] sm:$0xff]
    %v302 = vld [vmem:[%s287 + $0x70] sm:$0xff]
    %v303 = vld [vmem:[%s287 + $0x78] sm:$0xff]
    %304 = vmatprep.subr.mxu0 0.0
    %305 = vmatpush1.msra.mxu0 %v288
    %306 = vmatprep.subr.mxu0 0.0
    %307 = vmatpush1.msra.mxu0 %v289
    %308 = vmatprep.subr.mxu0 0.0
    %309 = vmatpush1.msra.mxu0 %v290
    %310 = vmatprep.subr.mxu0 0.0
    %311 = vmatpush1.msra.mxu0 %v291
    %312 = vmatprep.subr.mxu0 0.0
    %313 = vmatpush1.msra.mxu0 %v292
    %314 = vmatprep.subr.mxu0 0.0
    %315 = vmatpush1.msra.mxu0 %v293
    %316 = vmatprep.subr.mxu0 0.0
    %317 = vmatpush1.msra.mxu0 %v294
    %318 = vmatprep.subr.mxu0 0.0
    %319 = vmatpush1.msra.mxu0 %v295
    %320 = vmatprep.subr.mxu0 0.0
    %321 = vmatpush1.msra.mxu0 %v296
    %322 = vmatprep.subr.mxu0 0.0
    %323 = vmatpush1.msra.mxu0 %v297
    %324 = vmatprep.subr.mxu0 0.0
    %325 = vmatpush1.msra.mxu0 %v298
    %326 = vmatprep.subr.mxu0 0.0
    %327 = vmatpush1.msra.mxu0 %v299
    %328 = vmatprep.subr.mxu0 0.0
    %329 = vmatpush1.msra.mxu0 %v300
    %330 = vmatprep.subr.mxu0 0.0
    %331 = vmatpush1.msra.mxu0 %v301
    %332 = vmatprep.subr.mxu0 0.0
    %333 = vmatpush1.msra.mxu0 %v302
    %334 = vmatprep.subr.mxu0 0.0
    %335 = vmatpush1.msra.mxu0 %v303
    %336 = vmatprep.subr.mxu0 0.0
    %337 = vmatpush1.msra.mxu0 0.0
    %338 = vmatprep.subr.mxu0 0.0
    %339 = vmatpush1.msra.mxu0 0.0
    %340 = vmatprep.subr.mxu0 0.0
    %341 = vmatpush1.msra.mxu0 0.0
    %342 = vmatprep.subr.mxu0 0.0
    %343 = vmatpush1.msra.mxu0 0.0
    %344 = vmatprep.subr.mxu0 0.0
    %345 = vmatpush1.msra.mxu0 0.0
    %346 = vmatprep.subr.mxu0 0.0
    %347 = vmatpush1.msra.mxu0 0.0
    %348 = vmatprep.subr.mxu0 0.0
    %349 = vmatpush1.msra.mxu0 0.0
    %350 = vmatprep.subr.mxu0 0.0
    %351 = vmatpush1.msra.mxu0 0.0
    %352 = vmatprep.subr.mxu0 0.0
    %353 = vmatpush1.msra.mxu0 0.0
    %354 = vmatprep.subr.mxu0 0.0
    %355 = vmatpush1.msra.mxu0 0.0
    %356 = vmatprep.subr.mxu0 0.0
    %357 = vmatpush1.msra.mxu0 0.0
    %358 = vmatprep.subr.mxu0 0.0
    %359 = vmatpush1.msra.mxu0 0.0
    %360 = vmatprep.subr.mxu0 0.0
    %361 = vmatpush1.msra.mxu0 0.0
    %362 = vmatprep.subr.mxu0 0.0
    %363 = vmatpush1.msra.mxu0 0.0
    %364 = vmatprep.subr.mxu0 0.0
    %365 = vmatpush1.msra.mxu0 0.0
    %366 = vmatprep.subr.mxu0 0.0
    %367 = vmatpush1.msra.mxu0 0.0
    %368 = vmatprep.mubr.f32.mxu0 0.0
    %369 = vmatmul.mubr.f32.gmra.mrb[0].mxu0 %v269
    %v370 = vpop.f32.mrb[0].mxu0
    %v371 = vadd.f32 0.0, %v370
    %v372 = vpop.f32.mrb[0].mxu0
    %373 = vdwg.mxu0
    %s374 = scalar_lea.vmem %s4, 1
    %v375 = vld [vmem:[%s374] sm:$0x1]
    %v377 = vlaneseq
    %v378 = vshrl.u32 %v377, 7
    %v379 = vsub.s32 0, %v378
    %v380 = vrot.slane %v375, %v379
    %v382 = vmul.f32 %v371, %v380
    %383 = vmatprep.subr.mxu0 0.0
    %384 = vmatpush1.msra.mxu0 %v271
    %385 = vmatprep.subr.mxu0 0.0
    %386 = vmatpush1.msra.mxu0 %v272
    %387 = vmatprep.subr.mxu0 0.0
    %388 = vmatpush1.msra.mxu0 %v273
    %389 = vmatprep.subr.mxu0 0.0
    %390 = vmatpush1.msra.mxu0 %v274
    %391 = vmatprep.subr.mxu0 0.0
    %392 = vmatpush1.msra.mxu0 %v275
    %393 = vmatprep.subr.mxu0 0.0
    %394 = vmatpush1.msra.mxu0 %v276
    %395 = vmatprep.subr.mxu0 0.0
    %396 = vmatpush1.msra.mxu0 %v277
    %397 = vmatprep.subr.mxu0 0.0
    %398 = vmatpush1.msra.mxu0 %v278
    %399 = vmatprep.subr.mxu0 0.0
    %400 = vmatpush1.msra.mxu0 %v279
    %401 = vmatprep.subr.mxu0 0.0
    %402 = vmatpush1.msra.mxu0 %v280
    %403 = vmatprep.subr.mxu0 0.0
    %404 = vmatpush1.msra.mxu0 %v281
    %405 = vmatprep.subr.mxu0 0.0
    %406 = vmatpush1.msra.mxu0 %v282
    %407 = vmatprep.subr.mxu0 0.0
    %408 = vmatpush1.msra.mxu0 %v283
    %409 = vmatprep.subr.mxu0 0.0
    %410 = vmatpush1.msra.mxu0 %v284
    %411 = vmatprep.subr.mxu0 0.0
    %412 = vmatpush1.msra.mxu0 %v285
    %413 = vmatprep.subr.mxu0 0.0
    %414 = vmatpush1.msra.mxu0 %v286
    %415 = vmatprep.subr.mxu0 0.0
    %416 = vmatpush1.msra.mxu0 0.0
    %417 = vmatprep.subr.mxu0 0.0
    %418 = vmatpush1.msra.mxu0 0.0
    %419 = vmatprep.subr.mxu0 0.0
    %420 = vmatpush1.msra.mxu0 0.0
    %421 = vmatprep.subr.mxu0 0.0
    %422 = vmatpush1.msra.mxu0 0.0
    %423 = vmatprep.subr.mxu0 0.0
    %424 = vmatpush1.msra.mxu0 0.0
    %425 = vmatprep.subr.mxu0 0.0
    %426 = vmatpush1.msra.mxu0 0.0
    %427 = vmatprep.subr.mxu0 0.0
    %428 = vmatpush1.msra.mxu0 0.0
    %429 = vmatprep.subr.mxu0 0.0
    %430 = vmatpush1.msra.mxu0 0.0
    %431 = vmatprep.subr.mxu0 0.0
    %432 = vmatpush1.msra.mxu0 0.0
    %433 = vmatprep.subr.mxu0 0.0
    %434 = vmatpush1.msra.mxu0 0.0
    %435 = vmatprep.subr.mxu0 0.0
    %436 = vmatpush1.msra.mxu0 0.0
    %437 = vmatprep.subr.mxu0 0.0
    %438 = vmatpush1.msra.mxu0 0.0
    %439 = vmatprep.subr.mxu0 0.0
    %440 = vmatpush1.msra.mxu0 0.0
    %441 = vmatprep.subr.mxu0 0.0
    %442 = vmatpush1.msra.mxu0 0.0
    %443 = vmatprep.subr.mxu0 0.0
    %444 = vmatpush1.msra.mxu0 0.0
    %445 = vmatprep.subr.mxu0 0.0
    %446 = vmatpush1.msra.mxu0 0.0
    %447 = vmatprep.mubr.f32.mxu0 0.0
    %448 = vmatmul.mubr.f32.gmra.mrb[0].mxu0 %v260
    %v449 = vpop.f32.mrb[0].mxu0
    %v450 = vadd.f32 %v382, %v449
    %v451 = vpop.f32.mrb[0].mxu0
    %452 = vdwg.mxu0
    %s453 = scalar_lea.vmem %s5, 1
    %v454 = vld [vmem:[%s453] sm:$0x1]
    %v456 = vlaneseq
    %v457 = vshrl.u32 %v456, 7
    %v458 = vsub.s32 0, %v457
    %v459 = vrot.slane %v454, %v458
    %v461 = vadd.f32 %v450, %v459
    %v462 = vmax.f32 %v461, 0.0
    %s463 = scalar_lea.vmem %s3, 2
    %v464 = vld [vmem:[%s463] sm:$0x1]
    %v466 = vlaneseq
    %v467 = vshrl.u32 %v466, 7
    %v468 = vsub.s32 0, %v467
    %v469 = vrot.slane %v464, %v468
    %v471 = vmul.f32 %v462, %v469
    %s472 = scalar_lea.vmem [#allocation5], 256
    %v473 = vld [vmem:[%s472] sm:$0xff]
    %v474 = vld [vmem:[%s472 + $0x8] sm:$0xff]
    %v475 = vld [vmem:[%s472 + $0x10] sm:$0xff]
    %v476 = vld [vmem:[%s472 + $0x18] sm:$0xff]
    %v477 = vld [vmem:[%s472 + $0x20] sm:$0xff]
    %v478 = vld [vmem:[%s472 + $0x28] sm:$0xff]
    %v479 = vld [vmem:[%s472 + $0x30] sm:$0xff]
    %v480 = vld [vmem:[%s472 + $0x38] sm:$0xff]
    %v481 = vld [vmem:[%s472 + $0x40] sm:$0xff]
    %v482 = vld [vmem:[%s472 + $0x48] sm:$0xff]
    %v483 = vld [vmem:[%s472 + $0x50] sm:$0xff]
    %v484 = vld [vmem:[%s472 + $0x58] sm:$0xff]
    %v485 = vld [vmem:[%s472 + $0x60] sm:$0xff]
    %v486 = vld [vmem:[%s472 + $0x68] sm:$0xff]
    %v487 = vld [vmem:[%s472 + $0x70] sm:$0xff]
    %v488 = vld [vmem:[%s472 + $0x78] sm:$0xff]
    %s489 = scalar_lea.vmem [#allocation7], 256
    %v490 = vld [vmem:[%s489] sm:$0xff]
    %v491 = vld [vmem:[%s489 + $0x8] sm:$0xff]
    %v492 = vld [vmem:[%s489 + $0x10] sm:$0xff]
    %v493 = vld [vmem:[%s489 + $0x18] sm:$0xff]
    %v494 = vld [vmem:[%s489 + $0x20] sm:$0xff]
    %v495 = vld [vmem:[%s489 + $0x28] sm:$0xff]
    %v496 = vld [vmem:[%s489 + $0x30] sm:$0xff]
    %v497 = vld [vmem:[%s489 + $0x38] sm:$0xff]
    %v498 = vld [vmem:[%s489 + $0x40] sm:$0xff]
    %v499 = vld [vmem:[%s489 + $0x48] sm:$0xff]
    %v500 = vld [vmem:[%s489 + $0x50] sm:$0xff]
    %v501 = vld [vmem:[%s489 + $0x58] sm:$0xff]
    %v502 = vld [vmem:[%s489 + $0x60] sm:$0xff]
    %v503 = vld [vmem:[%s489 + $0x68] sm:$0xff]
    %v504 = vld [vmem:[%s489 + $0x70] sm:$0xff]
    %v505 = vld [vmem:[%s489 + $0x78] sm:$0xff]
    %506 = vmatprep.subr.mxu0 0.0
    %507 = vmatpush1.msra.mxu0 %v490
    %508 = vmatprep.subr.mxu0 0.0
    %509 = vmatpush1.msra.mxu0 %v491
    %510 = vmatprep.subr.mxu0 0.0
    %511 = vmatpush1.msra.mxu0 %v492
    %512 = vmatprep.subr.mxu0 0.0
    %513 = vmatpush1.msra.mxu0 %v493
    %514 = vmatprep.subr.mxu0 0.0
    %515 = vmatpush1.msra.mxu0 %v494
    %516 = vmatprep.subr.mxu0 0.0
    %517 = vmatpush1.msra.mxu0 %v495
    %518 = vmatprep.subr.mxu0 0.0
    %519 = vmatpush1.msra.mxu0 %v496
    %520 = vmatprep.subr.mxu0 0.0
    %521 = vmatpush1.msra.mxu0 %v497
    %522 = vmatprep.subr.mxu0 0.0
    %523 = vmatpush1.msra.mxu0 %v498
    %524 = vmatprep.subr.mxu0 0.0
    %525 = vmatpush1.msra.mxu0 %v499
    %526 = vmatprep.subr.mxu0 0.0
    %527 = vmatpush1.msra.mxu0 %v500
    %528 = vmatprep.subr.mxu0 0.0
    %529 = vmatpush1.msra.mxu0 %v501
    %530 = vmatprep.subr.mxu0 0.0
    %531 = vmatpush1.msra.mxu0 %v502
    %532 = vmatprep.subr.mxu0 0.0
    %533 = vmatpush1.msra.mxu0 %v503
    %534 = vmatprep.subr.mxu0 0.0
    %535 = vmatpush1.msra.mxu0 %v504
    %536 = vmatprep.subr.mxu0 0.0
    %537 = vmatpush1.msra.mxu0 %v505
    %538 = vmatprep.subr.mxu0 0.0
    %539 = vmatpush1.msra.mxu0 0.0
    %540 = vmatprep.subr.mxu0 0.0
    %541 = vmatpush1.msra.mxu0 0.0
    %542 = vmatprep.subr.mxu0 0.0
    %543 = vmatpush1.msra.mxu0 0.0
    %544 = vmatprep.subr.mxu0 0.0
    %545 = vmatpush1.msra.mxu0 0.0
    %546 = vmatprep.subr.mxu0 0.0
    %547 = vmatpush1.msra.mxu0 0.0
    %548 = vmatprep.subr.mxu0 0.0
    %549 = vmatpush1.msra.mxu0 0.0
    %550 = vmatprep.subr.mxu0 0.0
    %551 = vmatpush1.msra.mxu0 0.0
    %552 = vmatprep.subr.mxu0 0.0
    %553 = vmatpush1.msra.mxu0 0.0
    %554 = vmatprep.subr.mxu0 0.0
    %555 = vmatpush1.msra.mxu0 0.0
    %556 = vmatprep.subr.mxu0 0.0
    %557 = vmatpush1.msra.mxu0 0.0
    %558 = vmatprep.subr.mxu0 0.0
    %559 = vmatpush1.msra.mxu0 0.0
    %560 = vmatprep.subr.mxu0 0.0
    %561 = vmatpush1.msra.mxu0 0.0
    %562 = vmatprep.subr.mxu0 0.0
    %563 = vmatpush1.msra.mxu0 0.0
    %564 = vmatprep.subr.mxu0 0.0
    %565 = vmatpush1.msra.mxu0 0.0
    %566 = vmatprep.subr.mxu0 0.0
    %567 = vmatpush1.msra.mxu0 0.0
    %568 = vmatprep.subr.mxu0 0.0
    %569 = vmatpush1.msra.mxu0 0.0
    %570 = vmatprep.mubr.f32.mxu0 0.0
    %571 = vmatmul.mubr.f32.gmra.mrb[0].mxu0 %v471
    %v572 = vpop.f32.mrb[0].mxu0
    %v573 = vadd.f32 0.0, %v572
    %v574 = vpop.f32.mrb[0].mxu0
    %575 = vdwg.mxu0
    %s576 = scalar_lea.vmem %s4, 2
    %v577 = vld [vmem:[%s576] sm:$0x1]
    %v579 = vlaneseq
    %v580 = vshrl.u32 %v579, 7
    %v581 = vsub.s32 0, %v580
    %v582 = vrot.slane %v577, %v581
    %v584 = vmul.f32 %v573, %v582
    %585 = vmatprep.subr.mxu0 0.0
    %586 = vmatpush1.msra.mxu0 %v473
    %587 = vmatprep.subr.mxu0 0.0
    %588 = vmatpush1.msra.mxu0 %v474
    %589 = vmatprep.subr.mxu0 0.0
    %590 = vmatpush1.msra.mxu0 %v475
    %591 = vmatprep.subr.mxu0 0.0
    %592 = vmatpush1.msra.mxu0 %v476
    %593 = vmatprep.subr.mxu0 0.0
    %594 = vmatpush1.msra.mxu0 %v477
    %595 = vmatprep.subr.mxu0 0.0
    %596 = vmatpush1.msra.mxu0 %v478
    %597 = vmatprep.subr.mxu0 0.0
    %598 = vmatpush1.msra.mxu0 %v479
    %599 = vmatprep.subr.mxu0 0.0
    %600 = vmatpush1.msra.mxu0 %v480
    %601 = vmatprep.subr.mxu0 0.0
    %602 = vmatpush1.msra.mxu0 %v481
    %603 = vmatprep.subr.mxu0 0.0
    %604 = vmatpush1.msra.mxu0 %v482
    %605 = vmatprep.subr.mxu0 0.0
    %606 = vmatpush1.msra.mxu0 %v483
    %607 = vmatprep.subr.mxu0 0.0
    %608 = vmatpush1.msra.mxu0 %v484
    %609 = vmatprep.subr.mxu0 0.0
    %610 = vmatpush1.msra.mxu0 %v485
    %611 = vmatprep.subr.mxu0 0.0
    %612 = vmatpush1.msra.mxu0 %v486
    %613 = vmatprep.subr.mxu0 0.0
    %614 = vmatpush1.msra.mxu0 %v487
    %615 = vmatprep.subr.mxu0 0.0
    %616 = vmatpush1.msra.mxu0 %v488
    %617 = vmatprep.subr.mxu0 0.0
    %618 = vmatpush1.msra.mxu0 0.0
    %619 = vmatprep.subr.mxu0 0.0
    %620 = vmatpush1.msra.mxu0 0.0
    %621 = vmatprep.subr.mxu0 0.0
    %622 = vmatpush1.msra.mxu0 0.0
    %623 = vmatprep.subr.mxu0 0.0
    %624 = vmatpush1.msra.mxu0 0.0
    %625 = vmatprep.subr.mxu0 0.0
    %626 = vmatpush1.msra.mxu0 0.0
    %627 = vmatprep.subr.mxu0 0.0
    %628 = vmatpush1.msra.mxu0 0.0
    %629 = vmatprep.subr.mxu0 0.0
    %630 = vmatpush1.msra.mxu0 0.0
    %631 = vmatprep.subr.mxu0 0.0
    %632 = vmatpush1.msra.mxu0 0.0
    %633 = vmatprep.subr.mxu0 0.0
    %634 = vmatpush1.msra.mxu0 0.0
    %635 = vmatprep.subr.mxu0 0.0
    %636 = vmatpush1.msra.mxu0 0.0
    %637 = vmatprep.subr.mxu0 0.0
    %638 = vmatpush1.msra.mxu0 0.0
    %639 = vmatprep.subr.mxu0 0.0
    %640 = vmatpush1.msra.mxu0 0.0
    %641 = vmatprep.subr.mxu0 0.0
    %642 = vmatpush1.msra.mxu0 0.0
    %643 = vmatprep.subr.mxu0 0.0
    %644 = vmatpush1.msra.mxu0 0.0
    %645 = vmatprep.subr.mxu0 0.0
    %646 = vmatpush1.msra.mxu0 0.0
    %647 = vmatprep.subr.mxu0 0.0
    %648 = vmatpush1.msra.mxu0 0.0
    %649 = vmatprep.mubr.f32.mxu0 0.0
    %650 = vmatmul.mubr.f32.gmra.mrb[0].mxu0 %v462
    %v651 = vpop.f32.mrb[0].mxu0
    %v652 = vadd.f32 %v584, %v651
    %v653 = vpop.f32.mrb[0].mxu0
    %654 = vdwg.mxu0
    %s655 = scalar_lea.vmem %s5, 2
    %v656 = vld [vmem:[%s655] sm:$0x1]
    %v658 = vlaneseq
    %v659 = vshrl.u32 %v658, 7
    %v660 = vsub.s32 0, %v659
    %v661 = vrot.slane %v656, %v660
    %v663 = vadd.f32 %v652, %v661
    %664 = vst [vmem:[#allocation8] sm:$0xff] %v663
    // Predicated region
    $region38: #{tpu_custom_call.1} parent=1 // pred_check
      _
    $region39: #{tpu_custom_call.1} parent=1 // pred_check_branch
      %666 = sbr.rel (0) target = $region41
    $region40: #{tpu_custom_call.1} parent=1 // pred_region
      %s668 = ssub.s32 128, 128
      %669 = vsyncadd [#allocation4], %s668
      %s671 = sshll.u32 [#allocation8], 4
      %s672 = int_to_ptr.vmem [resolvable:$true] %s671
      %674 = dma.vmem_to_hbm [thread:$0]  %s672, 128, %s6, [#allocation4]
    $region41: #{tpu_custom_call.1} parent=1 // pred_fallthru
      _
    // Predicated region
    $region42: #{tpu_custom_call.1} parent=1 // pred_check
      _
    $region43: #{tpu_custom_call.1} parent=1 // pred_check_branch
      %676 = sbr.rel (0) target = $region45
    $region44: #{tpu_custom_call.1} parent=1 // pred_region
      %677 = dma.done [#allocation4], 128
    $region45: #{tpu_custom_call.1} parent=1 // pred_fallthru
      _
    %678 = vsyncpa [#allocation3], 1
    %679 = vsyncpa [#allocation6], 1
    %680 = vsyncpa [#allocation4], 1

</llo_original>
